<compile_context>
chip_gen: v7x
topology: tpu7x:2x2x1
jax: 0.10.0
libtpu: 0.0.40
codegen_flags: <defaults>
</compile_context>

<pallas_src>
import functools

import jax
import jax.numpy as jnp
from jax import lax
from jax.experimental import pallas as pl
from jax.experimental.pallas import tpu as pltpu


_NUM_PARTITIONS = 2  # per-core partials: ~2x on dual-TC v7x, neutral on v5e/v6e


def _round_up(x, m):
    return ((x + m - 1) // m) * m


def _soft_focal_kernel(x_ref, t_ref, o_ref, *, gamma):
    t_idx = pl.program_id(1)

    @pl.when(t_idx == 0)
    def _init():
        o_ref[...] = jnp.zeros_like(o_ref)

    x = x_ref[...].astype(jnp.float32)
    t = t_ref[...].astype(jnp.float32)

    # Numerically-stable log_softmax; reuse exp(shifted) for both the
    # normalizer and preds -> exactly one per-element transcendental (EUP).
    m = jnp.max(x, axis=-1, keepdims=True)
    shifted = x - m
    e = jnp.exp(shifted)
    s = jnp.sum(e, axis=-1, keepdims=True)
    log_preds = shifted - jnp.log(s)       # per-row log only
    preds = e * (1.0 / s)                  # per-row divide, then VPU multiply

    diff2 = (t - preds) ** 2
    exponent = float(gamma) / 2.0
    if exponent == 1.0:                    # gamma == 2  ->  (.)^2 already done
        w = diff2
    elif exponent.is_integer():            # even gamma  ->  VPU multiply chain
        w = lax.integer_pow(diff2, int(exponent))
    else:                                  # fractional  ->  EUP pow fallback
        w = jnp.power(diff2, exponent)

    loss_elem = -w * t * log_preds                                 # (TM, C)
    tm, c = loss_elem.shape
    # Per-step partial reduce as pure VPU vreg adds (no XLU cross-lane reduce,
    # no loop-carried scalar RMW); full reduction happens in the wrapper.
    partial = jnp.sum(loss_elem.reshape(tm // 8, 8, c), axis=0)    # (8, C)
    o_ref[...] += partial


def soft_focal_loss(x, targets, gamma=2, *, tile_rows=None):
    """Pallas implementation of soft_focal_loss.forward (returns scalar mean)."""
    c = x.shape[-1]
    x2 = x.reshape(-1, c)
    t2 = targets.reshape(-1, c)
    n = x2.shape[0]
    itemsize = 4  # rows are processed as f32 tiles

    # Chip-aware tile sizing: keep each pipelined input buffer <= ~4 MiB on
    # 64-MiB-VMEM v7x and <= ~8 MiB on 128-MiB v5e/v6e.
    try:
        vmem_cap = int(pltpu.get_tpu_info().vmem_capacity_bytes)
    except Exception:
        vmem_cap = 64 << 20  # conservative (v7x) fallback
    if tile_rows is None:
        per_buffer = min(8 << 20, vmem_cap // 16)
        tile_rows = per_buffer // (c * itemsize)
    tile_rows = max(8, min(2048, (tile_rows // 8) * 8))
    # Don't tile past what the data actually needs.
    rows_per_part = _round_up(-(-n // _NUM_PARTITIONS), 8)
    tile_rows = min(tile_rows, rows_per_part)

    # Pad rows to a multiple of tile_rows * partitions; padded target rows are
    # zero so they contribute exactly 0 to the loss sum.
    n_pad = _round_up(n, tile_rows * _NUM_PARTITIONS)
    if n_pad != n:
        pad = ((0, n_pad - n), (0, 0))
        x2 = jnp.pad(x2, pad)
        t2 = jnp.pad(t2, pad)
    tiles_per_part = n_pad // (tile_rows * _NUM_PARTITIONS)

    kernel = functools.partial(_soft_focal_kernel, gamma=gamma)

    in_buf_bytes = 2 * 2 * tile_rows * c * itemsize  # 2 inputs x double-buffer
    vmem_limit = min(int(vmem_cap * 0.9),
                     max(32 << 20, in_buf_bytes + (4 << 20)))

    cost = pl.CostEstimate(
        flops=10 * n_pad * c,
        transcendentals=n_pad * c + 2 * n_pad,
        bytes_accessed=2 * n_pad * c * itemsize + _NUM_PARTITIONS * 8 * c * 4,
    )

    partials = pl.pallas_call(
        kernel,
        out_shape=jax.ShapeDtypeStruct((_NUM_PARTITIONS, 8, c), jnp.float32),
        grid_spec=pltpu.PrefetchScalarGridSpec(
            num_scalar_prefetch=0,
            grid=(_NUM_PARTITIONS, tiles_per_part),
            in_specs=[
                pl.BlockSpec((tile_rows, c),
                             lambda p, t: (p * tiles_per_part + t, 0)),
                pl.BlockSpec((tile_rows, c),
                             lambda p, t: (p * tiles_per_part + t, 0)),
            ],
            out_specs=pl.BlockSpec((None, 8, c), lambda p, t: (p, 0, 0)),
        ),
        compiler_params=pltpu.CompilerParams(
            dimension_semantics=("parallel", "arbitrary"),
            vmem_limit_bytes=vmem_limit,
        ),
        cost_estimate=cost,
    )(x2, t2)

    # TODO(synk): optionally accept bf16 inputs to halve HBM traffic (mem-bound).
    return jnp.sum(partials) / jnp.float32(n)


def _reference(x, targets, gamma=2):
    log_preds = jax.nn.log_softmax(x, axis=-1)
    preds = jnp.exp(log_preds)
    loss = -jnp.power((targets - preds) ** 2, gamma / 2) * targets * log_preds
    loss = jnp.sum(loss, axis=-1)
    return jnp.mean(loss)


if __name__ == "__main__":
    key = jax.random.PRNGKey(0)
    kx, kt = jax.random.split(key)

    # small shapes: batch=2, seq=8, classes=128 (lane-aligned last dim)
    B, S, C = 2, 8, 128
    x = jax.random.normal(kx, (B, S, C), dtype=jnp.float32)
    t_logits = jax.random.normal(kt, (B, S, C), dtype=jnp.float32)
    targets = jax.nn.softmax(t_logits, axis=-1)   # soft targets, rows sum to 1

    out = soft_focal_loss(x, targets, gamma=2)
    out = jax.block_until_ready(out)

    ref = _reference(x, targets, gamma=2)
    assert jnp.allclose(out, ref, atol=1e-5, rtol=1e-5), (out, ref)
    print("KERNEL_OK")
</pallas_src>

<mosaic_0001>
module attributes {stable_mosaic.version = 11 : i64} {
  func.func @_soft_focal_kernel(%arg0: i32, %arg1: i32, %arg2: memref<8x128xf32, #tpu.memory_space<vmem>>, %arg3: memref<8x128xf32, #tpu.memory_space<vmem>>, %arg4: memref<1x8x128xf32, #tpu.memory_space<vmem>>) attributes {dimension_semantics = [#tpu.dimension_semantics<parallel>, #tpu.dimension_semantics<arbitrary>], iteration_bounds = array<i64: 2, 1>, scalar_prefetch = 0 : i64, scratch_operands = 0 : i64, tpu.core_type = #tpu.core_type<tc>, window_params = [{transform_indices = @transform_0, window_bounds = array<i64: 8, 128>}, {transform_indices = @transform_1, window_bounds = array<i64: 8, 128>}, {transform_indices = @transform_2, window_bounds = array<i64: 1, 8, 128>}]} {
    %c0_i32 = arith.constant 0 : i32
    %0 = arith.cmpi eq, %arg1, %c0_i32 : i32
    %1 = arith.extui %0 : i1 to i32
    %c0_i32_0 = arith.constant 0 : i32
    %2 = arith.cmpi ne, %1, %c0_i32_0 : i32
    scf.if %2 {
      %cst_14 = arith.constant 0.000000e+00 : f32
      %33 = vector.broadcast %cst_14 : f32 to vector<8x128xf32>
      %c0_15 = arith.constant 0 : index
      %c0_16 = arith.constant 0 : index
      %c0_17 = arith.constant 0 : index
      %34 = vector.load %arg4[%c0_15, %c0_16, %c0_17] : memref<1x8x128xf32, #tpu.memory_space<vmem>>, vector<1x8x128xf32>
      %35 = vector.shape_cast %34 : vector<1x8x128xf32> to vector<8x128xf32>
      %36 = vector.shape_cast %33 : vector<8x128xf32> to vector<1x8x128xf32>
      tpu.vector_store %arg4[%c0_15, %c0_16, %c0_17], %36 {strides = array<i32>} : memref<1x8x128xf32, #tpu.memory_space<vmem>>, vector<1x8x128xf32>,
    } else {
    }
    %c0 = arith.constant 0 : index
    %c0_1 = arith.constant 0 : index
    %3 = vector.load %arg2[%c0, %c0_1] : memref<8x128xf32, #tpu.memory_space<vmem>>, vector<8x128xf32>
    %c0_2 = arith.constant 0 : index
    %c0_3 = arith.constant 0 : index
    %4 = vector.load %arg3[%c0_2, %c0_3] : memref<8x128xf32, #tpu.memory_space<vmem>>, vector<8x128xf32>
    %cst = arith.constant dense<0xFF800000> : vector<8xf32>
    %5 = vector.multi_reduction <maximumf>, %3, %cst [1] : vector<8x128xf32> to vector<8xf32>
    %6 = vector.shape_cast %5 : vector<8xf32> to vector<8x1xf32>
    %7 = vector.broadcast %6 : vector<8x1xf32> to vector<8x128xf32>
    %8 = arith.subf %3, %7 : vector<8x128xf32>
    %9 = math.exp %8 : vector<8x128xf32>
    %cst_4 = arith.constant dense<0.000000e+00> : vector<8xf32>
    %10 = vector.multi_reduction <add>, %9, %cst_4 [1] : vector<8x128xf32> to vector<8xf32>
    %11 = vector.shape_cast %10 : vector<8xf32> to vector<8x1xf32>
    %12 = math.log %11 : vector<8x1xf32>
    %13 = vector.broadcast %12 : vector<8x1xf32> to vector<8x128xf32>
    %14 = arith.subf %8, %13 : vector<8x128xf32>
    %cst_5 = arith.constant 1.000000e+00 : f32
    %15 = vector.broadcast %cst_5 : f32 to vector<8x1xf32>
    %16 = arith.divf %15, %11 : vector<8x1xf32>
    %17 = vector.broadcast %16 : vector<8x1xf32> to vector<8x128xf32>
    %18 = arith.mulf %9, %17 : vector<8x128xf32>
    %19 = arith.subf %4, %18 : vector<8x128xf32>
    %20 = arith.mulf %19, %19 : vector<8x128xf32>
    %cst_6 = arith.constant 0.000000e+00 : f32
    %21 = vector.broadcast %cst_6 : f32 to vector<8x128xf32>
    %22 = arith.subf %21, %20 : vector<8x128xf32>
    %23 = arith.mulf %22, %4 : vector<8x128xf32>
    %24 = arith.mulf %23, %14 : vector<8x128xf32>
    %25 = vector.shape_cast %24 : vector<8x128xf32> to vector<1x8x128xf32>
    %cst_7 = arith.constant dense<0.000000e+00> : vector<8x128xf32>
    %26 = vector.multi_reduction <add>, %25, %cst_7 [0] : vector<1x8x128xf32> to vector<8x128xf32>
    %c0_8 = arith.constant 0 : index
    %c0_9 = arith.constant 0 : index
    %c0_10 = arith.constant 0 : index
    %27 = vector.load %arg4[%c0_8, %c0_9, %c0_10] : memref<1x8x128xf32, #tpu.memory_space<vmem>>, vector<1x8x128xf32>
    %28 = vector.shape_cast %27 : vector<1x8x128xf32> to vector<8x128xf32>
    %29 = arith.addf %28, %26 : vector<8x128xf32>
    %c0_11 = arith.constant 0 : index
    %c0_12 = arith.constant 0 : index
    %c0_13 = arith.constant 0 : index
    %30 = vector.load %arg4[%c0_11, %c0_12, %c0_13] : memref<1x8x128xf32, #tpu.memory_space<vmem>>, vector<1x8x128xf32>
    %31 = vector.shape_cast %30 : vector<1x8x128xf32> to vector<8x128xf32>
    %32 = vector.shape_cast %29 : vector<8x128xf32> to vector<1x8x128xf32>
    tpu.vector_store %arg4[%c0_11, %c0_12, %c0_13], %32 {strides = array<i32>} : memref<1x8x128xf32, #tpu.memory_space<vmem>>, vector<1x8x128xf32>,
    return
  }
  func.func @transform_0(%arg0: i32, %arg1: i32) -> (i32, i32) {
    %c1_i32 = arith.constant 1 : i32
    %0 = arith.muli %arg0, %c1_i32 : i32
    %1 = arith.addi %0, %arg1 : i32
    %c0_i32 = arith.constant 0 : i32
    %c0_i32_0 = arith.constant 0 : i32
    return %1, %c0_i32 : i32, i32
  }
  func.func @transform_1(%arg0: i32, %arg1: i32) -> (i32, i32) {
    %c1_i32 = arith.constant 1 : i32
    %0 = arith.muli %arg0, %c1_i32 : i32
    %1 = arith.addi %0, %arg1 : i32
    %c0_i32 = arith.constant 0 : i32
    %c0_i32_0 = arith.constant 0 : i32
    return %1, %c0_i32 : i32, i32
  }
  func.func @transform_2(%arg0: i32, %arg1: i32) -> (i32, i32, i32) {
    %c0_i32 = arith.constant 0 : i32
    %c0_i32_0 = arith.constant 0 : i32
    %c0_i32_1 = arith.constant 0 : i32
    return %arg0, %c0_i32, %c0_i32_0 : i32, i32, i32
  }
}

</mosaic_0001>

<llo_original>
// kernel: tpu_custom_call.1
$region0: #{tpu_custom_call.1}
  #allocation0 [shape = 'u32[]', space=smem, size = 0x4, offset = 0x4, fixed_abs, tag = 'smem constant byte address 0x4 - core index']
  #allocation1 [shape = 'u32[144,128]{1,0:T(1,128)}', space=vmem, size = 0x12000, scoped, tag = 'internal scratch']
  %s0 = inlined_call_operand.hbm [shape: f32[16,128], index: 0, kind: input, shape index: {}]
  %s1 = inlined_call_operand.hbm [shape: f32[16,128], index: 1, kind: input, shape index: {}]
  %s2 = inlined_call_operand.hbm [shape: f32[2,8,128], index: 2, kind: output, shape index: {}]
  %s3 = sld [smem:[#allocation0]]
  $region53: #{tpu_custom_call.1} parent=0
    _
  %s5 = ssub.s32 1, %s3
  %s6 = scalar_select 0, %s5, %s3
  $region1: #{tpu_custom_call.1} parent=0
    #allocation2 [shape = 'u8[8192]{0}', space=vmem, size = 0x2000, scoped, tag = 'input window, operand 0']
    #allocation3 [shape = 's32[2]{0}', space=sflag, size = 0x8, scoped, tag = 'scoped memory for tpu_custom_call.1']
    #allocation4 [shape = 's32[2]{0}', space=sflag, size = 0x8, scoped, tag = 'scoped memory for tpu_custom_call.1']
    #allocation5 [shape = 'u8[8192]{0}', space=vmem, size = 0x2000, scoped, tag = 'input window, operand 1']
    #allocation6 [shape = 's32[2]{0}', space=sflag, size = 0x8, scoped, tag = 'scoped memory for tpu_custom_call.1']
    #allocation7 [shape = 'u8[8192]{0}', space=vmem, size = 0x2000, scoped, tag = 'output window, operand 0']
    %7 = vsyncpa [#allocation3], 0
    %s8 = scalar_lea.sflag [#allocation3], 1
    %9 = vsyncpa %s8, 0
    %10 = vsyncpa [#allocation6], 0
    %s11 = scalar_lea.sflag [#allocation6], 1
    %12 = vsyncpa %s11, 0
    %13 = vsyncpa [#allocation4], 0
    %s14 = scalar_lea.sflag [#allocation4], 1
    %15 = vsyncpa %s14, 0
    loop: start=0, step=1, limit=4
    $region2: #{tpu_custom_call.1} parent=1 // loop_pre_header
      _
    $region3: #{tpu_custom_call.1} parent=1 // loop_header
      %s17 = sphi 0, %s21
      %p18 = scmp.ge.s32.totalorder %s17, 4
      %s24 = sphi 0, %s36
      %s25 = sphi 0, %s32
      %s26 = sphi 0, %s24
      %s27 = sphi 0, %s25
      %s28 = sphi 0, %s26
      %s29 = sphi 0, %s27
      %s41 = sphi 0, %s43
      %s44 = sphi 0, %s41
      %s45 = sphi 0, %s44
      %s61 = sphi 0, %s45
      %s69 = sphi 0, %s71
      %s72 = sphi 0, %s69
      %s73 = sphi 0, %s72
      %s89 = sphi 0, %s73
      %s95 = sphi 0, %s97
      %s98 = sphi 0, %s95
      %s99 = sphi 0, %s98
      %s115 = sphi 0, %s99
    $region4: #{tpu_custom_call.1} parent=1 // loop_header_branch
      %20 = sbr.rel (%p18) target = $region8
    $region5: #{tpu_custom_call.1} parent=1 // loop_body
      %s22 = ssub.s32 %s17, 1
      %s23 = ssub.s32 %s17, 2
      %s30 = sadd.s32 1, %s25
      %p31 = scmp.ge.s32.totalorder %s30, 1
      %s32 = scalar_select %p31, 0, %s30
      %s33 = sadd.s32 1, %s24
      %s34 = scalar_select %p31, %s33, %s24
      %p35 = scmp.ge.s32.totalorder %s34, 2
      %s36 = scalar_select %p35, 0, %s34
      %s37 = sadd.s32 %s24, %s25
      %s38 = sadd.s32 %s36, %s32
      %s39 = ssub.s32 %s37, %s38
      %p40 = scmp.eq.s32.totalorder %s39, 0
      %s42 = sadd.s32 %s41, 1
      %s43 = scalar_select %p40, %s41, %s42
      %p46 = pneg %p40
      %p47 = scmp.eq.s32.totalorder %s17, 1
      %p48 = por %p46, %p47
      %p49 = scmp.ne.s32.totalorder %s41, %s44
      %p50 = scmp.eq.s32.totalorder %s17, 0
      %p51 = por %p49, %p50
      %p52 = scmp.ne.s32.totalorder %s41, %s44
      %p53 = scmp.eq.s32.totalorder %s22, 1
      %p54 = por %p52, %p53
      %p55 = scmp.ne.s32.totalorder %s44, %s45
      %p56 = scmp.eq.s32.totalorder %s22, 0
      %p57 = por %p55, %p56
      %p58 = scmp.ne.s32.totalorder %s44, %s45
      %p59 = scmp.eq.s32.totalorder %s23, 1
      %p60 = por %p58, %p59
      %p62 = scmp.ne.s32.totalorder %s45, %s61
      %p63 = scmp.eq.s32.totalorder %s23, 0
      %p64 = por %p62, %p63
      %s65 = sadd.s32 %s24, %s25
      %s66 = sadd.s32 %s36, %s32
      %s67 = ssub.s32 %s65, %s66
      %p68 = scmp.eq.s32.totalorder %s67, 0
      %s70 = sadd.s32 %s69, 1
      %s71 = scalar_select %p68, %s69, %s70
      %p74 = pneg %p68
      %p75 = scmp.eq.s32.totalorder %s17, 1
      %p76 = por %p74, %p75
      %p77 = scmp.ne.s32.totalorder %s69, %s72
      %p78 = scmp.eq.s32.totalorder %s17, 0
      %p79 = por %p77, %p78
      %p80 = scmp.ne.s32.totalorder %s69, %s72
      %p81 = scmp.eq.s32.totalorder %s22, 1
      %p82 = por %p80, %p81
      %p83 = scmp.ne.s32.totalorder %s72, %s73
      %p84 = scmp.eq.s32.totalorder %s22, 0
      %p85 = por %p83, %p84
      %p86 = scmp.ne.s32.totalorder %s72, %s73
      %p87 = scmp.eq.s32.totalorder %s23, 1
      %p88 = por %p86, %p87
      %p90 = scmp.ne.s32.totalorder %s73, %s89
      %p91 = scmp.eq.s32.totalorder %s23, 0
      %p92 = por %p90, %p91
      %s93 = ssub.s32 %s24, %s36
      %p94 = scmp.eq.s32.totalorder %s93, 0
      %s96 = sadd.s32 %s95, 1
      %s97 = scalar_select %p94, %s95, %s96
      %p100 = pneg %p94
      %p101 = scmp.eq.s32.totalorder %s17, 1
      %p102 = por %p100, %p101
      %p103 = scmp.ne.s32.totalorder %s95, %s98
      %p104 = scmp.eq.s32.totalorder %s17, 0
      %p105 = por %p103, %p104
      %p106 = scmp.ne.s32.totalorder %s95, %s98
      %p107 = scmp.eq.s32.totalorder %s22, 1
      %p108 = por %p106, %p107
      %p109 = scmp.ne.s32.totalorder %s98, %s99
      %p110 = scmp.eq.s32.totalorder %s22, 0
      %p111 = por %p109, %p110
      %p112 = scmp.ne.s32.totalorder %s98, %s99
      %p113 = scmp.eq.s32.totalorder %s23, 1
      %p114 = por %p112, %p113
      %p116 = scmp.ne.s32.totalorder %s99, %s115
      %p117 = scmp.eq.s32.totalorder %s23, 0
      %p118 = por %p116, %p117
      %p119 = scmp.le.s32.totalorder 1, %s17
      %p120 = scmp.lt.s32.totalorder %s17, 3
      %p121 = pnand %p119, %p120
      %p122 = pneg %p121
      // Predicated region
      $region9: #{tpu_custom_call.1} parent=5 // pred_check
        _
      $region10: #{tpu_custom_call.1} parent=5 // pred_check_branch
        %124 = sbr.rel (%p121) target = $region12
      $region11: #{tpu_custom_call.1} parent=5 // pred_region
        %s125 = ssub.s32 %s17, 1
      $region12: #{tpu_custom_call.1} parent=5 // pred_fallthru
        _
      %p126 = scmp.lt.s32.totalorder %s17, 2
      // Predicated region
      $region13: #{tpu_custom_call.1} parent=5 // pred_check
        %p127 = pneg %p126
      $region14: #{tpu_custom_call.1} parent=5 // pred_check_branch
        %129 = sbr.rel (%p127) target = $region16
      $region15: #{tpu_custom_call.1} parent=5 // pred_region
        // Predicated region
        $region17: #{tpu_custom_call.1} parent=15 // pred_check
          %p130 = pneg %p51
        $region18: #{tpu_custom_call.1} parent=15 // pred_check_branch
          %132 = sbr.rel (%p130) target = $region20
        $region19: #{tpu_custom_call.1} parent=15 // pred_region
          %s133 = sand.u32 %s41, 1
          %s134 = scalar_lea.sflag [#allocation3], %s133
          %s135 = sand.u32 %s41, 1
          %s136 = smul.addr %s135, 8
          %s137 = scalar_lea.vmem [#allocation2], %s136
          %s138 = sadd.s32 %s24, %s25
          %s140 = ssub.s32 128, 128
          %141 = vsyncadd %s134, %s140
          %s142 = smul.addr %s138, 128
          %s143 = scalar_lea.hbm %s0, %s142
          %s145 = sshll.u32 %s137, 4
          %s146 = int_to_ptr.vmem [resolvable:$true] %s145
          %148 = dma.hbm_to_vmem [thread:$0]  %s143, 128, %s146, %s134
        $region20: #{tpu_custom_call.1} parent=15 // pred_fallthru
          _
        // Predicated region
        $region21: #{tpu_custom_call.1} parent=15 // pred_check
          %p149 = pneg %p79
        $region22: #{tpu_custom_call.1} parent=15 // pred_check_branch
          %151 = sbr.rel (%p149) target = $region24
        $region23: #{tpu_custom_call.1} parent=15 // pred_region
          %s152 = sand.u32 %s69, 1
          %s153 = scalar_lea.sflag [#allocation6], %s152
          %s154 = sand.u32 %s69, 1
          %s155 = smul.addr %s154, 8
          %s156 = scalar_lea.vmem [#allocation5], %s155
          %s157 = sadd.s32 %s24, %s25
          %s159 = ssub.s32 128, 128
          %160 = vsyncadd %s153, %s159
          %s161 = smul.addr %s157, 128
          %s162 = scalar_lea.hbm %s1, %s161
          %s164 = sshll.u32 %s156, 4
          %s165 = int_to_ptr.vmem [resolvable:$true] %s164
          %167 = dma.hbm_to_vmem [thread:$0]  %s162, 128, %s165, %s153
        $region24: #{tpu_custom_call.1} parent=15 // pred_fallthru
          _
      $region16: #{tpu_custom_call.1} parent=5 // pred_fallthru
        _
      %p168 = scmp.le.s32.totalorder 1, %s17
      %p169 = scmp.lt.s32.totalorder %s17, 3
      %p170 = pnand %p168, %p169
      %p171 = pneg %p170
      // Predicated region
      $region25: #{tpu_custom_call.1} parent=5 // pred_check
        _
      $region26: #{tpu_custom_call.1} parent=5 // pred_check_branch
        %173 = sbr.rel (%p170) target = $region28
      $region27: #{tpu_custom_call.1} parent=5 // pred_region
        %s174 = ssub.s32 %s17, 1
        %s175 = sand.u32 %s44, 1
        %s176 = scalar_lea.sflag [#allocation3], %s175
        %s177 = sand.u32 %s44, 1
        %s178 = smul.addr %s177, 8
        %s179 = scalar_lea.vmem [#allocation2], %s178
        // Predicated region
        $region29: #{tpu_custom_call.1} parent=27 // pred_check
          %p180 = pneg %p57
        $region30: #{tpu_custom_call.1} parent=27 // pred_check_branch
          %182 = sbr.rel (%p180) target = $region32
        $region31: #{tpu_custom_call.1} parent=27 // pred_region
          %183 = dma.done %s176, 128
        $region32: #{tpu_custom_call.1} parent=27 // pred_fallthru
          _
        %s184 = sand.u32 %s72, 1
        %s185 = scalar_lea.sflag [#allocation6], %s184
        %s186 = sand.u32 %s72, 1
        %s187 = smul.addr %s186, 8
        %s188 = scalar_lea.vmem [#allocation5], %s187
        // Predicated region
        $region33: #{tpu_custom_call.1} parent=27 // pred_check
          %p189 = pneg %p85
        $region34: #{tpu_custom_call.1} parent=27 // pred_check_branch
          %191 = sbr.rel (%p189) target = $region36
        $region35: #{tpu_custom_call.1} parent=27 // pred_region
          %192 = dma.done %s185, 128
        $region36: #{tpu_custom_call.1} parent=27 // pred_fallthru
          _
        %s193 = sand.u32 %s44, 1
        %s194 = scalar_lea.sflag [#allocation3], %s193
        %s195 = sand.u32 %s44, 1
        %s196 = smul.addr %s195, 8
        %s197 = scalar_lea.vmem [#allocation2], %s196
        %p198 = pneg %p57
        %p199 = pneg %p54
        %s200 = sand.u32 %s72, 1
        %s201 = scalar_lea.sflag [#allocation6], %s200
        %s202 = sand.u32 %s72, 1
        %s203 = smul.addr %s202, 8
        %s204 = scalar_lea.vmem [#allocation5], %s203
        %p205 = pneg %p85
        %p206 = pneg %p82
        %p207 = pneg %p111
        %p208 = pneg %p108
        %s209 = sand.u32 %s98, 1
        %s210 = scalar_lea.sflag [#allocation4], %s209
        %s211 = sand.u32 %s98, 1
        %s212 = smul.addr %s211, 8
        %s213 = scalar_lea.vmem [#allocation7], %s212
        %s214 = sadd.s32 %s26, %s27
        %s215 = sadd.s32 %s26, %s27
        %p216 = scmp.eq.s32.totalorder %s27, 0
        // Predicated region
        $region37: #{tpu_custom_call.1} parent=27 // pred_check
          %p217 = pneg %p216
        $region38: #{tpu_custom_call.1} parent=27 // pred_check_branch
          %219 = sbr.rel (%p217) target = $region40
        $region39: #{tpu_custom_call.1} parent=27 // pred_region
          %220 = vst [vmem:[%s213] sm:$0xff] 0.0
        $region40: #{tpu_custom_call.1} parent=27 // pred_fallthru
          _
        %v221 = vld [vmem:[%s179] sm:$0xff]
        %v222 = vld [vmem:[%s188] sm:$0xff]
        %223 = vmax.xlane.f32.xlu0 %v221
        %v224 = vpop.xlane.xlu0 %223
        %v225 = vsub.f32 %v221, %v224
        %v226 = vmul.f32 %v225, 1.442695
        %v227 = vpow.pop %v226
        %228 = vadd.xlane.f32.xlu0 %v227
        %v229 = vpop.xlane.xlu0 %228
        %v230 = vlog2.pop %v229
        %v231 = vmul.f32 %v230, 0.6931472
        %v232 = vsub.f32 %v225, %v231
        %v233 = vrcp.pop %v229
        %v234 = vmul.f32 1.0, %v233
        %v235 = vmul.f32 %v227, %v234
        %v236 = vsub.f32 %v222, %v235
        %v237 = vmul.f32 %v236, %v236
        %v238 = vsub.f32 0.0, %v237
        %v239 = vmul.f32 %v238, %v222
        %v240 = vmul.f32 %v239, %v232
        %v241 = vadd.f32 %v240, 0.0
        %v242 = vld [vmem:[%s213] sm:$0xff]
        %v243 = vadd.f32 %v242, %v241
        %244 = vst [vmem:[%s213] sm:$0xff] %v243
        %s245 = sand.u32 %s98, 1
        %s246 = scalar_lea.sflag [#allocation4], %s245
        %s247 = sand.u32 %s98, 1
        %s248 = smul.addr %s247, 8
        %s249 = scalar_lea.vmem [#allocation7], %s248
        // Predicated region
        $region41: #{tpu_custom_call.1} parent=27 // pred_check
          %p250 = pneg %p108
        $region42: #{tpu_custom_call.1} parent=27 // pred_check_branch
          %252 = sbr.rel (%p250) target = $region44
        $region43: #{tpu_custom_call.1} parent=27 // pred_region
          %s254 = ssub.s32 128, 128
          %255 = vsyncadd %s246, %s254
          %s256 = smul.addr %s26, 128
          %s257 = scalar_lea.hbm %s2, %s256
          %s259 = sshll.u32 %s249, 4
          %s260 = int_to_ptr.vmem [resolvable:$true] %s259
          %262 = dma.vmem_to_hbm [thread:$0]  %s260, 128, %s257, %s246
        $region44: #{tpu_custom_call.1} parent=27 // pred_fallthru
          _
      $region28: #{tpu_custom_call.1} parent=5 // pred_fallthru
        _
      %p263 = scmp.le.s32.totalorder 2, %s17
      // Predicated region
      $region45: #{tpu_custom_call.1} parent=5 // pred_check
        %p264 = pneg %p263
      $region46: #{tpu_custom_call.1} parent=5 // pred_check_branch
        %266 = sbr.rel (%p264) target = $region48
      $region47: #{tpu_custom_call.1} parent=5 // pred_region
        %s267 = ssub.s32 %s17, 2
        // Predicated region
        $region49: #{tpu_custom_call.1} parent=47 // pred_check
          %p268 = pneg %p114
        $region50: #{tpu_custom_call.1} parent=47 // pred_check_branch
          %270 = sbr.rel (%p268) target = $region52
        $region51: #{tpu_custom_call.1} parent=47 // pred_region
          %s271 = sand.u32 %s99, 1
          %s272 = scalar_lea.sflag [#allocation4], %s271
          %s273 = sand.u32 %s99, 1
          %s274 = smul.addr %s273, 8
          %s275 = scalar_lea.vmem [#allocation7], %s274
          %276 = dma.done %s272, 128
        $region52: #{tpu_custom_call.1} parent=47 // pred_fallthru
          _
      $region48: #{tpu_custom_call.1} parent=5 // pred_fallthru
        _
    $region6: #{tpu_custom_call.1} parent=1 // loop_footer
      %s21 = sadd.s32 1, %s17
    $region7: #{tpu_custom_call.1} parent=1 // loop_footer_branch
      %16 = sbr.rel target = $region3
    $region8: #{tpu_custom_call.1} parent=1 // loop_exit
      _
    %277 = vsyncpa [#allocation3], 1
    %s278 = scalar_lea.sflag [#allocation3], 1
    %279 = vsyncpa %s278, 1
    %280 = vsyncpa [#allocation6], 1
    %s281 = scalar_lea.sflag [#allocation6], 1
    %282 = vsyncpa %s281, 1
    %283 = vsyncpa [#allocation4], 1
    %s284 = scalar_lea.sflag [#allocation4], 1
    %285 = vsyncpa %s284, 1

</llo_original>
